<compile_context>
chip_gen: v6e
topology: v6e:2x2x1
jax: 0.10.0
libtpu: 0.0.40
codegen_flags: <defaults>
</compile_context>

<pallas_src>
import functools

import jax
import jax.numpy as jnp
from jax import lax
from jax.experimental import pallas as pl
from jax.experimental.pallas import tpu as pltpu

DTYPE = jnp.bfloat16
RMS_EPS = 1e-6
SPIKE_THRESHOLD = 1.0
VMEM_LIMIT = 48 * 1024 * 1024   # stay under v7x's 64 MiB physical VMEM


def _tile(dim, target):
    """Tile size: `target` if it evenly divides `dim`, else the whole dim."""
    return target if (dim >= target and dim % target == 0) else dim


# --------------------------------------------------------------------------
# Fused RMSNorm + matmul (used for norm1+QKV and final_norm+lm_head)
# --------------------------------------------------------------------------
def _rmsnorm_matmul_kernel(x_ref, nw_ref, w_ref, o_ref):
    x = x_ref[...].astype(jnp.float32)                              # [tm, D]
    inv = lax.rsqrt(jnp.mean(x * x, axis=-1, keepdims=True) + RMS_EPS)
    xn = (x * inv * nw_ref[...].astype(jnp.float32)).astype(jnp.bfloat16)
    o_ref[...] = jnp.dot(xn, w_ref[...],
                         preferred_element_type=jnp.float32).astype(o_ref.dtype)


def rmsnorm_matmul(x2d, norm_w, w, *, tm=256, tn=256):
    T, D = x2d.shape
    N = w.shape[1]
    tm = _tile(T, tm)
    tn = _tile(N, tn)
    return pl.pallas_call(
        _rmsnorm_matmul_kernel,
        grid=(T // tm, N // tn),
        out_shape=jax.ShapeDtypeStruct((T, N), DTYPE),
        in_specs=[
            pl.BlockSpec((tm, D), lambda i, j: (i, 0)),
            pl.BlockSpec((1, D), lambda i, j: (0, 0)),
            pl.BlockSpec((D, tn), lambda i, j: (0, j)),
        ],
        out_specs=pl.BlockSpec((tm, tn), lambda i, j: (i, j)),
        compiler_params=pltpu.CompilerParams(
            dimension_semantics=("parallel", "parallel"),
            vmem_limit_bytes=VMEM_LIMIT),
    )(x2d, norm_w, w)


# --------------------------------------------------------------------------
# Tiled matmul with fused residual add (attention output projection)
# --------------------------------------------------------------------------
def _matmul_residual_kernel(x_ref, w_ref, r_ref, o_ref, acc_ref):
    @pl.when(pl.program_id(2) == 0)
    def _():
        acc_ref[...] = jnp.zeros_like(acc_ref)

    acc_ref[...] += jnp.dot(x_ref[...], w_ref[...],
                            preferred_element_type=jnp.float32)

    @pl.when(pl.program_id(2) == pl.num_programs(2) - 1)
    def _():
        o_ref[...] = (acc_ref[...] + r_ref[...].astype(jnp.float32)).astype(o_ref.dtype)


def matmul_residual(x2d, w, resid, *, tm=256, tn=256, tk=512):
    T, K = x2d.shape
    N = w.shape[1]
    tm = _tile(T, tm)
    tn = _tile(N, tn)
    tk = _tile(K, tk)
    return pl.pallas_call(
        _matmul_residual_kernel,
        grid=(T // tm, N // tn, K // tk),
        out_shape=jax.ShapeDtypeStruct((T, N), DTYPE),
        in_specs=[
            pl.BlockSpec((tm, tk), lambda i, j, k: (i, k)),
            pl.BlockSpec((tk, tn), lambda i, j, k: (k, j)),
            pl.BlockSpec((tm, tn), lambda i, j, k: (i, j)),
        ],
        out_specs=pl.BlockSpec((tm, tn), lambda i, j, k: (i, j)),
        scratch_shapes=[pltpu.VMEM((tm, tn), jnp.float32)],
        compiler_params=pltpu.CompilerParams(
            dimension_semantics=("parallel", "parallel", "arbitrary"),
            vmem_limit_bytes=VMEM_LIMIT),
    )(x2d, w, resid)


# --------------------------------------------------------------------------
# Fused norm2 + SwiGLU + spike + down projection + residual (FFN sub-block)
# --------------------------------------------------------------------------
def _spiking_ffn_kernel(x_ref, nw_ref, wg_ref, wu_ref, wd_ref, o_ref, acc_ref):
    h_idx = pl.program_id(1)

    @pl.when(h_idx == 0)
    def _():
        acc_ref[...] = jnp.zeros_like(acc_ref)

    x = x_ref[...].astype(jnp.float32)                              # [tm, D]
    inv = lax.rsqrt(jnp.mean(x * x, axis=-1, keepdims=True) + RMS_EPS)
    xn = (x * inv * nw_ref[...].astype(jnp.float32)).astype(jnp.bfloat16)

    g = jnp.dot(xn, wg_ref[...], preferred_element_type=jnp.float32)   # [tm, th]
    u = jnp.dot(xn, wu_ref[...], preferred_element_type=jnp.float32)
    h = (g * jax.nn.sigmoid(g)) * u                                 # SiLU(gate) * up
    # Single-step LIF (membrane reset each forward): spike = heaviside(h - 1).
    spk = (h >= SPIKE_THRESHOLD).astype(jnp.bfloat16)               # 0/1 exact in bf16
    acc_ref[...] += jnp.dot(spk, wd_ref[...], preferred_element_type=jnp.float32)

    @pl.when(h_idx == pl.num_programs(1) - 1)
    def _():
        o_ref[...] = (acc_ref[...] + x).astype(o_ref.dtype)         # fused residual


def spiking_ffn(x2d, norm_w, wg, wu, wd, *, beta, tm=256, th=256):
    del beta  # TODO(synk): beta only matters across timesteps; single-step forward.
    T, D = x2d.shape
    H = wg.shape[1]
    tm = _tile(T, tm)
    th = _tile(H, th)
    return pl.pallas_call(
        _spiking_ffn_kernel,
        grid=(T // tm, H // th),
        out_shape=jax.ShapeDtypeStruct((T, D), DTYPE),
        in_specs=[
            pl.BlockSpec((tm, D), lambda i, h: (i, 0)),
            pl.BlockSpec((1, D), lambda i, h: (0, 0)),
            pl.BlockSpec((D, th), lambda i, h: (0, h)),
            pl.BlockSpec((D, th), lambda i, h: (0, h)),
            pl.BlockSpec((th, D), lambda i, h: (h, 0)),
        ],
        out_specs=pl.BlockSpec((tm, D), lambda i, h: (i, 0)),
        scratch_shapes=[pltpu.VMEM((tm, D), jnp.float32)],
        compiler_params=pltpu.CompilerParams(
            dimension_semantics=("parallel", "arbitrary"),
            vmem_limit_bytes=VMEM_LIMIT),
    )(x2d, norm_w, wg, wu, wd)


# --------------------------------------------------------------------------
# Flash-style sliding-window grouped attention
# --------------------------------------------------------------------------
def _flash_window_kernel(q_ref, k_ref, v_ref, o_ref, m_sc, l_sc, acc_sc, *,
                         window, tq, tkv, nkv_steps, scale):
    qi = pl.program_id(2)
    s = pl.program_id(3)

    @pl.when(s == 0)
    def _():
        m_sc[...] = jnp.full_like(m_sc, -1e30)
        l_sc[...] = jnp.zeros_like(l_sc)
        acc_sc[...] = jnp.zeros_like(acc_sc)

    diag_blk = (qi * tq + tq - 1) // tkv
    blk = diag_blk - (nkv_steps - 1) + s        # may be < 0 for pre-window steps

    @pl.when(blk >= 0)
    def _():
        # Fold 1/sqrt(hd) into q (O(tq*hd) instead of O(tq*tkv)).
        q = (q_ref[0, 0].astype(jnp.float32) * scale).astype(jnp.bfloat16)  # [tq, hd]
        k = k_ref[0, 0]                                                     # [tkv, hd]
        v = v_ref[0, 0]
        sc = lax.dot_general(q, k, (((1,), (1,)), ((), ())),
                             preferred_element_type=jnp.float32)            # [tq, tkv]
        row = qi * tq + lax.broadcasted_iota(jnp.int32, (tq, tkv), 0)
        col = blk * tkv + lax.broadcasted_iota(jnp.int32, (tq, tkv), 1)
        mask = (col <= row) & ((row - col) < window)                        # causal window
        sc = jnp.where(mask, sc, -1e30)
        m_cur = jnp.max(sc, axis=-1, keepdims=True)
        m_new = jnp.maximum(m_sc[...], m_cur)
        alpha = jnp.exp(m_sc[...] - m_new)
        p = jnp.where(mask, jnp.exp(sc - m_new), 0.0)
        l_sc[...] = alpha * l_sc[...] + jnp.sum(p, axis=-1, keepdims=True)
        acc_sc[...] = alpha * acc_sc[...] + jnp.dot(
            p.astype(jnp.bfloat16), v, preferred_element_type=jnp.float32)
        m_sc[...] = m_new

    @pl.when(s == nkv_steps - 1)
    def _():
        o_ref[0, 0] = (acc_sc[...] *
                       pl.reciprocal(l_sc[...], approx=True)).astype(o_ref.dtype)


def flash_window_attention(q, k, v, *, window, tq=128, tkv=128):
    B, Hq, S, hd = q.shape
    Hkv = k.shape[1]
    group = Hq // Hkv
    tq = _tile(S, tq)
    tkv = _tile(S, tkv)
    num_q_tiles = S // tq
    scale = 1.0 / float(hd) ** 0.5

    def first_blk(qi):
        return max(0, qi * tq - (window - 1)) // tkv

    def diag_blk(qi):
        return (qi * tq + tq - 1) // tkv

    # Only KV blocks intersecting the sliding window are ever fetched.
    nkv_steps = max(diag_blk(qi) - first_blk(qi) + 1 for qi in range(num_q_tiles))

    def kv_map(b, h, qi, s):
        blk = (qi * tq + tq - 1) // tkv - (nkv_steps - 1) + s
        return (b, h // group, jnp.maximum(blk, 0), 0)

    kern = functools.partial(_flash_window_kernel, window=window, tq=tq,
                             tkv=tkv, nkv_steps=nkv_steps, scale=scale)
    return pl.pallas_call(
        kern,
        grid=(B, Hq, num_q_tiles, nkv_steps),
        out_shape=jax.ShapeDtypeStruct((B, Hq, S, hd), q.dtype),
        in_specs=[
            pl.BlockSpec((1, 1, tq, hd), lambda b, h, qi, s: (b, h, qi, 0)),
            pl.BlockSpec((1, 1, tkv, hd), kv_map),
            pl.BlockSpec((1, 1, tkv, hd), kv_map),
        ],
        out_specs=pl.BlockSpec((1, 1, tq, hd), lambda b, h, qi, s: (b, h, qi, 0)),
        scratch_shapes=[pltpu.VMEM((tq, 1), jnp.float32),
                        pltpu.VMEM((tq, 1), jnp.float32),
                        pltpu.VMEM((tq, hd), jnp.float32)],
        compiler_params=pltpu.CompilerParams(
            dimension_semantics=("parallel", "parallel", "parallel", "arbitrary"),
            vmem_limit_bytes=VMEM_LIMIT),
    )(q, k, v)


# --------------------------------------------------------------------------
# Plain-JAX glue (RoPE tables, parameter init, model driver)
# --------------------------------------------------------------------------
def rope_tables(seq_len, head_dim, theta):
    inv_freq = 1.0 / (theta ** (jnp.arange(0, head_dim, 2, dtype=jnp.float32)
                                / head_dim))
    t = jnp.arange(seq_len, dtype=jnp.float32)
    ang = jnp.outer(t, inv_freq)                             # [S, hd/2]
    emb = jnp.concatenate([ang, ang], axis=-1)               # [S, hd]
    return jnp.cos(emb), jnp.sin(emb)


def apply_rope(x, cos, sin):
    # x: [B, H, S, hd]; cos/sin: [S, hd] (fp32)
    xf = x.astype(jnp.float32)
    hd = xf.shape[-1]
    x1, x2 = xf[..., : hd // 2], xf[..., hd // 2:]
    rot = jnp.concatenate([-x2, x1], axis=-1)
    return (xf * cos + rot * sin).astype(x.dtype)


def init_params(key, cfg):
    def dense(k, shape, scale=0.02):
        return (jax.random.normal(k, shape, dtype=jnp.float32) * scale).astype(DTYPE)

    D = cfg["d_model"]
    Hq, Hkv = cfg["n_heads"], cfg["n_kv_heads"]
    hd = D // Hq
    Hid = cfg["intermediate_size"]
    V = cfg["vocab_size"]

    keys = jax.random.split(key, 2 + cfg["num_layers"])
    params = {
        "token_emb": dense(keys[0], (V, D)),
        "final_norm_w": jnp.ones((1, D), DTYPE),
        "lm_head": dense(keys[1], (D, V)),
        "layers": [],
    }
    for li in range(cfg["num_layers"]):
        lk = jax.random.split(keys[2 + li], 7)
        wq = dense(lk[0], (D, Hq * hd))
        wk = dense(lk[1], (D, Hkv * hd))
        wv = dense(lk[2], (D, Hkv * hd))
        params["layers"].append({
            "norm1_w": jnp.ones((1, D), DTYPE),
            "norm2_w": jnp.ones((1, D), DTYPE),
            # QKV weights concatenated so one fused rmsnorm+matmul produces Q,K,V.
            "wqkv": jnp.concatenate([wq, wk, wv], axis=1),
            "wo": dense(lk[3], (Hq * hd, D)),
            "wg": dense(lk[4], (D, Hid)),
            "wu": dense(lk[5], (D, Hid)),
            "wd": dense(lk[6], (Hid, D)),
        })
    return params


def spiking_llm_forward(params, input_ids, cfg):
    B, S = input_ids.shape
    D = cfg["d_model"]
    Hq, Hkv = cfg["n_heads"], cfg["n_kv_heads"]
    hd = D // Hq
    dq, dkv = Hq * hd, Hkv * hd

    # Embedding lookup stays in XLA (gather); dropout: identity (eval).
    x2d = jnp.take(params["token_emb"], input_ids, axis=0).reshape(B * S, D)

    cos, sin = rope_tables(S, hd, cfg["rope_theta_local"])
    # TODO(synk): cfg["rope_theta_global"] unused — any per-layer local/global
    # alternation of the reference model is unspecified; all layers use the
    # local theta + sliding-window mask.

    presents = []
    for layer in params["layers"]:
        # --- attention sub-block: fused norm1 + QKV projection ---
        qkv = rmsnorm_matmul(x2d, layer["norm1_w"], layer["wqkv"])
        q = qkv[:, :dq].reshape(B, S, Hq, hd).transpose(0, 2, 1, 3)
        k = qkv[:, dq:dq + dkv].reshape(B, S, Hkv, hd).transpose(0, 2, 1, 3)
        v = qkv[:, dq + dkv:].reshape(B, S, Hkv, hd).transpose(0, 2, 1, 3)
        q = apply_rope(q, cos, sin)
        k = apply_rope(k, cos, sin)
        attn = flash_window_attention(q, k, v, window=cfg["window_size"])
        # TODO(synk): with hd>=128 the out_spec could emit [B,S,Hq*hd] directly
        # (lane-dense store); toy hd=8 forces this XLA transpose instead.
        attn2d = attn.transpose(0, 2, 1, 3).reshape(B * S, dq)
        # fused output projection + residual add
        x2d = matmul_residual(attn2d, layer["wo"], x2d)
        # --- FFN sub-block: fused norm2 + SwiGLU + spike + down proj + residual ---
        x2d = spiking_ffn(x2d, layer["norm2_w"], layer["wg"], layer["wu"],
                          layer["wd"], beta=cfg["beta"])
        presents.append(None)  # TODO(synk): use_cache / KV-cache path not implemented

    # fused final_norm + lm_head
    logits = rmsnorm_matmul(x2d, params["final_norm_w"],
                            params["lm_head"]).reshape(B, S, cfg["vocab_size"])
    return logits, presents


# --------------------------------------------------------------------------
if __name__ == "__main__":
    cfg = dict(
        vocab_size=64,
        d_model=32,
        n_heads=4,
        n_kv_heads=2,
        num_layers=2,
        intermediate_size=64,
        max_seq_len=2048,
        rope_theta_local=10000.0,
        rope_theta_global=1000000.0,
        window_size=4,
        beta=0.95,
    )

    key = jax.random.PRNGKey(0)
    pkey, dkey = jax.random.split(key)
    params = init_params(pkey, cfg)

    B, S = 2, 8
    input_ids = jax.random.randint(dkey, (B, S), 0, cfg["vocab_size"],
                                   dtype=jnp.int32)

    logits, presents = spiking_llm_forward(params, input_ids, cfg)
    logits = jax.block_until_ready(logits)
    assert logits.shape == (B, S, cfg["vocab_size"])
    assert logits.dtype == DTYPE
    assert jnp.isfinite(logits.astype(jnp.float32)).all()
    print("KERNEL_OK")
</pallas_src>

<mosaic_0001>
module attributes {stable_mosaic.version = 11 : i64} {
  func.func @_rmsnorm_matmul_kernel(%arg0: i32, %arg1: i32, %arg2: memref<16x32xbf16, #tpu.memory_space<vmem>>, %arg3: memref<1x32xbf16, #tpu.memory_space<vmem>>, %arg4: memref<32x64xbf16, #tpu.memory_space<vmem>>, %arg5: memref<16x64xbf16, #tpu.memory_space<vmem>>) attributes {dimension_semantics = [#tpu.dimension_semantics<parallel>, #tpu.dimension_semantics<parallel>], iteration_bounds = array<i64: 1, 1>, scalar_prefetch = 0 : i64, scratch_operands = 0 : i64, tpu.core_type = #tpu.core_type<tc>, window_params = [{transform_indices = @transform_0, window_bounds = array<i64: 16, 32>}, {pipeline_mode = #tpu.pipeline_mode<synchronous>, transform_indices = @transform_1, window_bounds = array<i64: 1, 32>}, {transform_indices = @transform_2, window_bounds = array<i64: 32, 64>}, {transform_indices = @transform_3, window_bounds = array<i64: 16, 64>}]} {
    %c0 = arith.constant 0 : index
    %c0_0 = arith.constant 0 : index
    %0 = vector.load %arg2[%c0, %c0_0] : memref<16x32xbf16, #tpu.memory_space<vmem>>, vector<16x32xbf16>
    %1 = arith.extf %0 : vector<16x32xbf16> to vector<16x32xf32>
    %2 = arith.mulf %1, %1 : vector<16x32xf32>
    %cst = arith.constant dense<0.000000e+00> : vector<16xf32>
    %3 = vector.multi_reduction <add>, %2, %cst [1] : vector<16x32xf32> to vector<16xf32>
    %4 = vector.shape_cast %3 : vector<16xf32> to vector<16x1xf32>
    %cst_1 = arith.constant 3.200000e+01 : f32
    %5 = vector.broadcast %cst_1 : f32 to vector<16x1xf32>
    %6 = arith.divf %4, %5 : vector<16x1xf32>
    %cst_2 = arith.constant 9.99999997E-7 : f32
    %7 = vector.broadcast %cst_2 : f32 to vector<16x1xf32>
    %8 = arith.addf %6, %7 : vector<16x1xf32>
    %9 = math.rsqrt %8 : vector<16x1xf32>
    %10 = vector.broadcast %9 : vector<16x1xf32> to vector<16x32xf32>
    %11 = arith.mulf %1, %10 : vector<16x32xf32>
    %c0_3 = arith.constant 0 : index
    %c0_4 = arith.constant 0 : index
    %12 = vector.load %arg3[%c0_3, %c0_4] : memref<1x32xbf16, #tpu.memory_space<vmem>>, vector<1x32xbf16>
    %13 = arith.extf %12 : vector<1x32xbf16> to vector<1x32xf32>
    %14 = vector.broadcast %13 : vector<1x32xf32> to vector<16x32xf32>
    %15 = arith.mulf %11, %14 : vector<16x32xf32>
    %16 = arith.truncf %15 : vector<16x32xf32> to vector<16x32xbf16>
    %c0_5 = arith.constant 0 : index
    %c0_6 = arith.constant 0 : index
    %17 = vector.load %arg4[%c0_5, %c0_6] : memref<32x64xbf16, #tpu.memory_space<vmem>>, vector<32x64xbf16>
    %cst_7 = arith.constant dense<0.000000e+00> : vector<16x64xf32>
    %18 = tpu.matmul %16, %17, %cst_7 {dimension_numbers = #tpu.dot_dimension_numbers<[1], [0], [0], [1], [0, 0, 1, 1], [], []>} : vector<16x32xbf16>, vector<32x64xbf16>, vector<16x64xf32> -> vector<16x64xf32>
    %19 = arith.truncf %18 : vector<16x64xf32> to vector<16x64xbf16>
    %c0_8 = arith.constant 0 : index
    %c0_9 = arith.constant 0 : index
    %20 = vector.load %arg5[%c0_8, %c0_9] : memref<16x64xbf16, #tpu.memory_space<vmem>>, vector<16x64xbf16>
    tpu.vector_store %arg5[%c0_8, %c0_9], %19 {strides = array<i32>} : memref<16x64xbf16, #tpu.memory_space<vmem>>, vector<16x64xbf16>,
    return
  }
  func.func @transform_0(%arg0: i32, %arg1: i32) -> (i32, i32) {
    %c0_i32 = arith.constant 0 : i32
    %c0_i32_0 = arith.constant 0 : i32
    return %arg0, %c0_i32 : i32, i32
  }
  func.func @transform_1(%arg0: i32, %arg1: i32) -> (i32, i32) {
    %c0_i32 = arith.constant 0 : i32
    %c0_i32_0 = arith.constant 0 : i32
    %c0_i32_1 = arith.constant 0 : i32
    return %c0_i32, %c0_i32_0 : i32, i32
  }
  func.func @transform_2(%arg0: i32, %arg1: i32) -> (i32, i32) {
    %c0_i32 = arith.constant 0 : i32
    %c0_i32_0 = arith.constant 0 : i32
    return %c0_i32, %arg1 : i32, i32
  }
  func.func @transform_3(%arg0: i32, %arg1: i32) -> (i32, i32) {
    %c0_i32 = arith.constant 0 : i32
    return %arg0, %arg1 : i32, i32
  }
}

</mosaic_0001>

<llo_original>
// kernel: tpu_custom_call.1
$region0: #{tpu_custom_call.1}
  #allocation0 [shape = 'u32[]', space=smem, size = 0x4, offset = 0x4, fixed_abs, tag = 'smem constant byte address 0x4 - core index']
  #allocation1 [shape = 'u32[144,128]{1,0:T(1,128)}', space=vmem, size = 0x12000, scoped, tag = 'internal scratch']
  %s0 = inlined_call_operand.hbm [shape: bf16[16,32], index: 0, kind: input, shape index: {}]
  %s1 = inlined_call_operand.vmem [shape: bf16[1,32], index: 1, kind: input, shape index: {}]
  %s2 = inlined_call_operand.hbm [shape: bf16[32,64], index: 2, kind: input, shape index: {}]
  %s3 = inlined_call_operand.hbm [shape: bf16[16,64], index: 3, kind: output, shape index: {}]
  %s4 = sld [smem:[#allocation0]]
  $region30: #{tpu_custom_call.1} parent=0
    _
  %s6 = ssub.s32 1, %s4
  %s7 = scalar_select 0, %s6, %s4
  $region1: #{tpu_custom_call.1} parent=0
    #allocation2 [shape = 'u8[4096]{0}', space=vmem, size = 0x1000, scoped, tag = 'input window, operand 0, single buffered']
    #allocation3 [shape = 's32[1]{0}', space=sflag, size = 0x4, scoped, tag = 'scoped memory for tpu_custom_call.1']
    #allocation4 [shape = 's32[1]{0}', space=sflag, size = 0x4, scoped, tag = 'scoped memory for tpu_custom_call.1']
    #allocation5 [shape = 'u8[8192]{0}', space=vmem, size = 0x2000, scoped, tag = 'input window, operand 2, single buffered']
    #allocation6 [shape = 's32[1]{0}', space=sflag, size = 0x4, scoped, tag = 'scoped memory for tpu_custom_call.1']
    #allocation7 [shape = 'u8[4096]{0}', space=vmem, size = 0x1000, scoped, tag = 'output window, operand 0, single buffered']
    %8 = vsyncpa [#allocation3], 0
    %9 = vsyncpa [#allocation6], 0
    %10 = vsyncpa [#allocation4], 0
    // Predicated region
    $region2: #{tpu_custom_call.1} parent=1 // pred_check
      _
    $region3: #{tpu_custom_call.1} parent=1 // pred_check_branch
      %12 = sbr.rel (0) target = $region5
    $region4: #{tpu_custom_call.1} parent=1 // pred_region
      %s14 = ssub.s32 128, 128
      %15 = vsyncadd [#allocation3], %s14
      %s16 = sshll.u32 [#allocation2], 4
      %s17 = int_to_ptr.vmem [resolvable:$true] %s16
      %22 = dma.hbm_to_vmem [thread:$0]  %s0, 128, %s17, [#allocation3], 64, 64, 4
    $region5: #{tpu_custom_call.1} parent=1 // pred_fallthru
      _
    // Predicated region
    $region6: #{tpu_custom_call.1} parent=1 // pred_check
      _
    $region7: #{tpu_custom_call.1} parent=1 // pred_check_branch
      %24 = sbr.rel (0) target = $region9
    $region8: #{tpu_custom_call.1} parent=1 // pred_region
      _
    $region9: #{tpu_custom_call.1} parent=1 // pred_fallthru
      _
    // Predicated region
    $region10: #{tpu_custom_call.1} parent=1 // pred_check
      _
    $region11: #{tpu_custom_call.1} parent=1 // pred_check_branch
      %26 = sbr.rel (0) target = $region13
    $region12: #{tpu_custom_call.1} parent=1 // pred_region
      %s28 = ssub.s32 256, 256
      %29 = vsyncadd [#allocation6], %s28
      %s30 = sshll.u32 [#allocation5], 4
      %s31 = int_to_ptr.vmem [resolvable:$true] %s30
      %36 = dma.hbm_to_vmem [thread:$0]  %s2, 256, %s31, [#allocation6], 64, 64, 4
    $region13: #{tpu_custom_call.1} parent=1 // pred_fallthru
      _
    // Predicated region
    $region14: #{tpu_custom_call.1} parent=1 // pred_check
      _
    $region15: #{tpu_custom_call.1} parent=1 // pred_check_branch
      %38 = sbr.rel (0) target = $region17
    $region16: #{tpu_custom_call.1} parent=1 // pred_region
      %39 = dma.done [#allocation3], 128
    $region17: #{tpu_custom_call.1} parent=1 // pred_fallthru
      _
    // Predicated region
    $region18: #{tpu_custom_call.1} parent=1 // pred_check
      _
    $region19: #{tpu_custom_call.1} parent=1 // pred_check_branch
      %41 = sbr.rel (0) target = $region21
    $region20: #{tpu_custom_call.1} parent=1 // pred_region
      %42 = dma.done [#allocation6], 256
    $region21: #{tpu_custom_call.1} parent=1 // pred_fallthru
      _
    %v44 = vld [vmem:[#allocation2] sm:$0xf]
    %v45 = vld [vmem:[#allocation2 + $0x4] sm:$0xf]
    %v46 = vunpack.c.l.bf16 %v44
    %v47 = vunpack.c.l.bf16 %v45
    %v48 = vmul.f32 %v46, %v46
    %v49 = vmul.f32 %v47, %v47
    %vm50 = vcmask 261120
    %v51 = vsel %vm50, %v48, 0.0
    %52 = vadd.xlane.f32.xlu0 %v51
    %v53 = vpop.xlane.xlu0 %52
    %v54 = vsel %vm50, %v49, 0.0
    %55 = vadd.xlane.f32.xlu0 %v54
    %v56 = vpop.xlane.xlu0 %55
    %v57 = vrcp.pop 32.0
    %v58 = vmul.f32 %v53, %v57
    %v59 = vmul.f32 %v56, %v57
    %v60 = vadd.f32 %v58, 1e-06
    %v61 = vadd.f32 %v59, 1e-06
    %v62 = vrsqrt.pop %v60
    %v63 = vrsqrt.pop %v61
    %v64 = vmul.f32 %v46, %v62
    %v65 = vmul.f32 %v47, %v63
    %v66 = vld [vmem:[%s1] sm:$0x1]
    %v67 = vunpack.c.l.bf16 %v66
    %v68 = vlaneseq
    %v69 = vshrl.u32 %v68, 7
    %v70 = vsub.s32 0, %v69
    %v71 = vrot.slane %v67, %v70
    %v72 = vmul.f32 %v64, %v71
    %v73 = vmul.f32 %v65, %v71
    %v74 = vpack.c.bf16 %v73, %v72
    %v75 = vld [vmem:[#allocation5] sm:$0xf]
    %v76 = vld [vmem:[#allocation5 + $0x4] sm:$0xf]
    %v77 = vld [vmem:[#allocation5 + $0x8] sm:$0xf]
    %v78 = vld [vmem:[#allocation5 + $0xc] sm:$0xf]
    %v83 = vunpack.c.l.b16 %v75
    %v84 = vunpack.c.l.b16 %v76
    %v85 = vunpack.c.l.b16 %v77
    %v86 = vunpack.c.l.b16 %v78
    %v87 = vpack.c.b16 %v84, %v83
    %v88 = vpack.c.b16 %v86, %v85
    %v92 = vsel %vm50, %v74, 0
    %94 = vmatprep.subr.bf16.mxu0 0
    %95 = vmatpush1.bf16.msra.mxu0 0
    %96 = vmatprep.subr.bf16.mxu0 0
    %97 = vmatpush1.bf16.msra.mxu0 0
    %98 = vmatprep.subr.bf16.mxu0 0
    %99 = vmatpush1.bf16.msra.mxu0 0
    %100 = vmatprep.subr.bf16.mxu0 0
    %101 = vmatpush1.bf16.msra.mxu0 0
    %102 = vmatprep.subr.bf16.mxu0 0
    %103 = vmatpush1.bf16.msra.mxu0 0
    %104 = vmatprep.subr.bf16.mxu0 0
    %105 = vmatpush1.bf16.msra.mxu0 0
    %106 = vmatprep.subr.bf16.mxu0 0
    %107 = vmatpush1.bf16.msra.mxu0 %v88
    %108 = vmatprep.subr.bf16.mxu0 0
    %109 = vmatpush1.bf16.msra.mxu0 %v87
    %110 = vmatprep.subr.bf16.mxu0 0
    %111 = vmatpush2.bf16.msra.mxu0 0
    %112 = vmatprep.subr.bf16.mxu0 0
    %113 = vmatpush2.bf16.msra.mxu0 0
    %114 = vmatprep.subr.bf16.mxu0 0
    %115 = vmatpush2.bf16.msra.mxu0 0
    %116 = vmatprep.subr.bf16.mxu0 0
    %117 = vmatpush2.bf16.msra.mxu0 0
    %118 = vmatprep.subr.bf16.mxu0 0
    %119 = vmatpush2.bf16.msra.mxu0 0
    %120 = vmatprep.subr.bf16.mxu0 0
    %121 = vmatpush2.bf16.msra.mxu0 0
    %122 = vmatprep.subr.bf16.mxu0 0
    %123 = vmatpush2.bf16.msra.mxu0 0
    %124 = vmatprep.subr.bf16.mxu0 0
    %125 = vmatpush2.bf16.msra.mxu0 0
    %126 = vmatprep.mubr.bf16.mxu0 0
    %127 = vmatmul.mubr.bf16.gmra.mxu0 %v92
    %v128 = vpop.f32.mrf.mxu0
    %v129 = vadd.f32 0.0, %v128
    %v130 = vpop.f32.mrf.mxu0
    %v131 = vpop.f32.mrf.mxu0
    %v132 = vadd.f32 0.0, %v131
    %v133 = vpop.f32.mrf.mxu0
    %134 = vdwg.mxu0
    %v135 = vpack.c.bf16 %v132, %v129
    %v137 = vunpack.c.l.b16 %v135
    %v138 = vunpack.c.h.b16 %v135
    %v139 = vpack.c.b16 %v137, %v137
    %v140 = vpack.c.b16 %v138, %v138
    %vm143 = vcmask 519168
    %144 = vst.msk [vmem:[#allocation7] sm:$0xf] %vm143, %v139
    %145 = vst.msk [vmem:[#allocation7 + $0x4] sm:$0xf] %vm143, %v140
    // Predicated region
    $region22: #{tpu_custom_call.1} parent=1 // pred_check
      _
    $region23: #{tpu_custom_call.1} parent=1 // pred_check_branch
      %147 = sbr.rel (0) target = $region25
    $region24: #{tpu_custom_call.1} parent=1 // pred_region
      %s149 = ssub.s32 128, 128
      %150 = vsyncadd [#allocation4], %s149
      %s151 = sshll.u32 [#allocation7], 4
      %s152 = int_to_ptr.vmem [resolvable:$true] %s151
      %157 = dma.vmem_to_hbm [thread:$0]  %s152, 128, %s3, [#allocation4], 64, 64, 4
    $region25: #{tpu_custom_call.1} parent=1 // pred_fallthru
      _
    // Predicated region
    $region26: #{tpu_custom_call.1} parent=1 // pred_check
      _
    $region27: #{tpu_custom_call.1} parent=1 // pred_check_branch
      %159 = sbr.rel (0) target = $region29
    $region28: #{tpu_custom_call.1} parent=1 // pred_region
      %160 = dma.done [#allocation4], 128
    $region29: #{tpu_custom_call.1} parent=1 // pred_fallthru
      _
    %161 = vsyncpa [#allocation3], 1
    %162 = vsyncpa [#allocation6], 1
    %163 = vsyncpa [#allocation4], 1

</llo_original>
